<compile_context>
chip_gen: v5e
topology: v5e:2x2
jax: 0.10.0
libtpu: 0.0.40
codegen_flags: <defaults>
</compile_context>

<pallas_src>
import jax
import jax.numpy as jnp
from jax.experimental import pallas as pl
from jax.experimental.pallas import tpu as pltpu

F_IN = 5
F_OUT = 5


def _linear_vpu_kernel(w_ref, x_ref, o_ref):
    """VPU linear layer in transposed (feature, batch) layout.

    w_ref: (F_OUT, F_IN) f32 in SMEM  -- PyTorch (out, in) weight, untransposed
    x_ref: (F_IN,  TB)   f32 in VMEM  -- batch along the lane axis
    o_ref: (F_OUT, TB)   f32 in VMEM  -- o[j, :] = sum_k w[j, k] * x[k, :]
    """
    # Hoist the 5 lane-dense input rows once per tile.
    rows = [x_ref[k:k + 1, :] for k in range(F_IN)]
    for j in range(F_OUT):
        acc = w_ref[j, 0] * rows[0]
        for k in range(1, F_IN):
            acc = acc + w_ref[j, k] * rows[k]
        o_ref[j:j + 1, :] = acc.astype(o_ref.dtype)


def simplenet_forward(batch: jax.Array, weight: jax.Array, *, tile_b: int = 512) -> jax.Array:
    """Forward pass of SimpleNet: batch @ weight.T (no bias).

    batch:  (B, 5) float32
    weight: (5, 5) float32, PyTorch Linear convention (out_features, in_features)
    returns (B, 5) float32
    """
    b, f_in = batch.shape
    f_out, f_in_w = weight.shape
    assert f_in == F_IN and f_out == F_OUT and f_in_w == F_IN

    # Lane-dense layout: put the batch dimension on the 128-wide lane axis.
    x_t = batch.T  # (f_in, b)

    # Lane tile: multiple of 128, at most `tile_b`; pad batch up to a multiple.
    tb = min(tile_b, pl.cdiv(b, 128) * 128)
    b_pad = pl.cdiv(b, tb) * tb
    if b_pad != b:
        x_t = jnp.pad(x_t, ((0, 0), (0, b_pad - b)))

    out_t = pl.pallas_call(
        _linear_vpu_kernel,
        out_shape=jax.ShapeDtypeStruct((f_out, b_pad), batch.dtype),
        grid_spec=pltpu.PrefetchScalarGridSpec(
            num_scalar_prefetch=0,
            grid=(b_pad // tb,),
            in_specs=[
                # Tiny weight lives in SMEM; read as broadcast scalars.
                pl.BlockSpec(memory_space=pltpu.MemorySpace.SMEM),
                # Lane-dense (5, tb) input tile, double-buffered by Pallas.
                pl.BlockSpec((f_in, tb), lambda i: (0, i)),
            ],
            out_specs=pl.BlockSpec((f_out, tb), lambda i: (0, i)),
        ),
        compiler_params=pltpu.CompilerParams(
            # Batch tiles are independent -> megacore-shardable on v7x.
            dimension_semantics=("parallel",),
        ),
        cost_estimate=pl.CostEstimate(
            flops=2 * f_out * f_in * b_pad,
            transcendentals=0,
            bytes_accessed=4 * (f_in * b_pad + f_out * b_pad + f_out * f_in),
        ),
    )(weight, x_t)

    # Back to the module's (B, 5) row-major convention.
    return out_t[:, :b].T


if __name__ == "__main__":
    key = jax.random.PRNGKey(0)
    # Mini-batch of input vectors of length 5.
    x = jax.random.normal(key, (8, 5), dtype=jnp.float32)

    # Deterministic parameter init matching the module: W = 2 * I(5).
    weight = 2.0 * jnp.eye(5, dtype=jnp.float32)

    fwd = jax.jit(simplenet_forward)  # fuse wrapper-side layout ops with the call
    out = jax.block_until_ready(fwd(x, weight))

    assert out.shape == x.shape
    assert jnp.allclose(out, 2.0 * x, atol=1e-6), "mismatch vs 2*x reference"
    print("KERNEL_OK")
</pallas_src>

<mosaic_0001>
module attributes {stable_mosaic.version = 11 : i64} {
  func.func @_linear_vpu_kernel(%arg0: i32, %arg1: memref<5x5xf32, #tpu.memory_space<smem>>, %arg2: memref<5x128xf32, #tpu.memory_space<vmem>>, %arg3: memref<5x128xf32, #tpu.memory_space<vmem>>) attributes {dimension_semantics = [#tpu.dimension_semantics<parallel>], iteration_bounds = array<i64: 1>, scalar_prefetch = 0 : i64, scratch_operands = 0 : i64, tpu.core_type = #tpu.core_type<tc>, window_params = [{transform_indices = @transform_0, window_bounds = array<i64: 5, 5>}, {transform_indices = @transform_1, window_bounds = array<i64: 5, 128>}, {transform_indices = @transform_2, window_bounds = array<i64: 5, 128>}]} {
    %c0 = arith.constant 0 : index
    %c0_0 = arith.constant 0 : index
    %0 = vector.load %arg2[%c0, %c0_0] : memref<5x128xf32, #tpu.memory_space<vmem>>, vector<1x128xf32>
    %c1 = arith.constant 1 : index
    %c0_1 = arith.constant 0 : index
    %1 = vector.load %arg2[%c1, %c0_1] : memref<5x128xf32, #tpu.memory_space<vmem>>, vector<1x128xf32>
    %c2 = arith.constant 2 : index
    %c0_2 = arith.constant 0 : index
    %2 = vector.load %arg2[%c2, %c0_2] : memref<5x128xf32, #tpu.memory_space<vmem>>, vector<1x128xf32>
    %c3 = arith.constant 3 : index
    %c0_3 = arith.constant 0 : index
    %3 = vector.load %arg2[%c3, %c0_3] : memref<5x128xf32, #tpu.memory_space<vmem>>, vector<1x128xf32>
    %c4 = arith.constant 4 : index
    %c0_4 = arith.constant 0 : index
    %4 = vector.load %arg2[%c4, %c0_4] : memref<5x128xf32, #tpu.memory_space<vmem>>, vector<1x128xf32>
    %c0_5 = arith.constant 0 : index
    %c0_6 = arith.constant 0 : index
    %5 = memref.load %arg1[%c0_5, %c0_6] : memref<5x5xf32, #tpu.memory_space<smem>>
    %6 = vector.broadcast %5 : f32 to vector<1x128xf32>
    %7 = arith.mulf %6, %0 : vector<1x128xf32>
    %c0_7 = arith.constant 0 : index
    %c1_8 = arith.constant 1 : index
    %8 = memref.load %arg1[%c0_7, %c1_8] : memref<5x5xf32, #tpu.memory_space<smem>>
    %9 = vector.broadcast %8 : f32 to vector<1x128xf32>
    %10 = arith.mulf %9, %1 : vector<1x128xf32>
    %11 = arith.addf %7, %10 : vector<1x128xf32>
    %c0_9 = arith.constant 0 : index
    %c2_10 = arith.constant 2 : index
    %12 = memref.load %arg1[%c0_9, %c2_10] : memref<5x5xf32, #tpu.memory_space<smem>>
    %13 = vector.broadcast %12 : f32 to vector<1x128xf32>
    %14 = arith.mulf %13, %2 : vector<1x128xf32>
    %15 = arith.addf %11, %14 : vector<1x128xf32>
    %c0_11 = arith.constant 0 : index
    %c3_12 = arith.constant 3 : index
    %16 = memref.load %arg1[%c0_11, %c3_12] : memref<5x5xf32, #tpu.memory_space<smem>>
    %17 = vector.broadcast %16 : f32 to vector<1x128xf32>
    %18 = arith.mulf %17, %3 : vector<1x128xf32>
    %19 = arith.addf %15, %18 : vector<1x128xf32>
    %c0_13 = arith.constant 0 : index
    %c4_14 = arith.constant 4 : index
    %20 = memref.load %arg1[%c0_13, %c4_14] : memref<5x5xf32, #tpu.memory_space<smem>>
    %21 = vector.broadcast %20 : f32 to vector<1x128xf32>
    %22 = arith.mulf %21, %4 : vector<1x128xf32>
    %23 = arith.addf %19, %22 : vector<1x128xf32>
    %c0_15 = arith.constant 0 : index
    %c0_16 = arith.constant 0 : index
    %24 = vector.load %arg3[%c0_15, %c0_16] : memref<5x128xf32, #tpu.memory_space<vmem>>, vector<1x128xf32>
    tpu.vector_store %arg3[%c0_15, %c0_16], %23 {strides = array<i32>} : memref<5x128xf32, #tpu.memory_space<vmem>>, vector<1x128xf32>,
    %c1_17 = arith.constant 1 : index
    %c0_18 = arith.constant 0 : index
    %25 = memref.load %arg1[%c1_17, %c0_18] : memref<5x5xf32, #tpu.memory_space<smem>>
    %26 = vector.broadcast %25 : f32 to vector<1x128xf32>
    %27 = arith.mulf %26, %0 : vector<1x128xf32>
    %c1_19 = arith.constant 1 : index
    %c1_20 = arith.constant 1 : index
    %28 = memref.load %arg1[%c1_19, %c1_20] : memref<5x5xf32, #tpu.memory_space<smem>>
    %29 = vector.broadcast %28 : f32 to vector<1x128xf32>
    %30 = arith.mulf %29, %1 : vector<1x128xf32>
    %31 = arith.addf %27, %30 : vector<1x128xf32>
    %c1_21 = arith.constant 1 : index
    %c2_22 = arith.constant 2 : index
    %32 = memref.load %arg1[%c1_21, %c2_22] : memref<5x5xf32, #tpu.memory_space<smem>>
    %33 = vector.broadcast %32 : f32 to vector<1x128xf32>
    %34 = arith.mulf %33, %2 : vector<1x128xf32>
    %35 = arith.addf %31, %34 : vector<1x128xf32>
    %c1_23 = arith.constant 1 : index
    %c3_24 = arith.constant 3 : index
    %36 = memref.load %arg1[%c1_23, %c3_24] : memref<5x5xf32, #tpu.memory_space<smem>>
    %37 = vector.broadcast %36 : f32 to vector<1x128xf32>
    %38 = arith.mulf %37, %3 : vector<1x128xf32>
    %39 = arith.addf %35, %38 : vector<1x128xf32>
    %c1_25 = arith.constant 1 : index
    %c4_26 = arith.constant 4 : index
    %40 = memref.load %arg1[%c1_25, %c4_26] : memref<5x5xf32, #tpu.memory_space<smem>>
    %41 = vector.broadcast %40 : f32 to vector<1x128xf32>
    %42 = arith.mulf %41, %4 : vector<1x128xf32>
    %43 = arith.addf %39, %42 : vector<1x128xf32>
    %c1_27 = arith.constant 1 : index
    %c0_28 = arith.constant 0 : index
    %44 = vector.load %arg3[%c1_27, %c0_28] : memref<5x128xf32, #tpu.memory_space<vmem>>, vector<1x128xf32>
    tpu.vector_store %arg3[%c1_27, %c0_28], %43 {strides = array<i32>} : memref<5x128xf32, #tpu.memory_space<vmem>>, vector<1x128xf32>,
    %c2_29 = arith.constant 2 : index
    %c0_30 = arith.constant 0 : index
    %45 = memref.load %arg1[%c2_29, %c0_30] : memref<5x5xf32, #tpu.memory_space<smem>>
    %46 = vector.broadcast %45 : f32 to vector<1x128xf32>
    %47 = arith.mulf %46, %0 : vector<1x128xf32>
    %c2_31 = arith.constant 2 : index
    %c1_32 = arith.constant 1 : index
    %48 = memref.load %arg1[%c2_31, %c1_32] : memref<5x5xf32, #tpu.memory_space<smem>>
    %49 = vector.broadcast %48 : f32 to vector<1x128xf32>
    %50 = arith.mulf %49, %1 : vector<1x128xf32>
    %51 = arith.addf %47, %50 : vector<1x128xf32>
    %c2_33 = arith.constant 2 : index
    %c2_34 = arith.constant 2 : index
    %52 = memref.load %arg1[%c2_33, %c2_34] : memref<5x5xf32, #tpu.memory_space<smem>>
    %53 = vector.broadcast %52 : f32 to vector<1x128xf32>
    %54 = arith.mulf %53, %2 : vector<1x128xf32>
    %55 = arith.addf %51, %54 : vector<1x128xf32>
    %c2_35 = arith.constant 2 : index
    %c3_36 = arith.constant 3 : index
    %56 = memref.load %arg1[%c2_35, %c3_36] : memref<5x5xf32, #tpu.memory_space<smem>>
    %57 = vector.broadcast %56 : f32 to vector<1x128xf32>
    %58 = arith.mulf %57, %3 : vector<1x128xf32>
    %59 = arith.addf %55, %58 : vector<1x128xf32>
    %c2_37 = arith.constant 2 : index
    %c4_38 = arith.constant 4 : index
    %60 = memref.load %arg1[%c2_37, %c4_38] : memref<5x5xf32, #tpu.memory_space<smem>>
    %61 = vector.broadcast %60 : f32 to vector<1x128xf32>
    %62 = arith.mulf %61, %4 : vector<1x128xf32>
    %63 = arith.addf %59, %62 : vector<1x128xf32>
    %c2_39 = arith.constant 2 : index
    %c0_40 = arith.constant 0 : index
    %64 = vector.load %arg3[%c2_39, %c0_40] : memref<5x128xf32, #tpu.memory_space<vmem>>, vector<1x128xf32>
    tpu.vector_store %arg3[%c2_39, %c0_40], %63 {strides = array<i32>} : memref<5x128xf32, #tpu.memory_space<vmem>>, vector<1x128xf32>,
    %c3_41 = arith.constant 3 : index
    %c0_42 = arith.constant 0 : index
    %65 = memref.load %arg1[%c3_41, %c0_42] : memref<5x5xf32, #tpu.memory_space<smem>>
    %66 = vector.broadcast %65 : f32 to vector<1x128xf32>
    %67 = arith.mulf %66, %0 : vector<1x128xf32>
    %c3_43 = arith.constant 3 : index
    %c1_44 = arith.constant 1 : index
    %68 = memref.load %arg1[%c3_43, %c1_44] : memref<5x5xf32, #tpu.memory_space<smem>>
    %69 = vector.broadcast %68 : f32 to vector<1x128xf32>
    %70 = arith.mulf %69, %1 : vector<1x128xf32>
    %71 = arith.addf %67, %70 : vector<1x128xf32>
    %c3_45 = arith.constant 3 : index
    %c2_46 = arith.constant 2 : index
    %72 = memref.load %arg1[%c3_45, %c2_46] : memref<5x5xf32, #tpu.memory_space<smem>>
    %73 = vector.broadcast %72 : f32 to vector<1x128xf32>
    %74 = arith.mulf %73, %2 : vector<1x128xf32>
    %75 = arith.addf %71, %74 : vector<1x128xf32>
    %c3_47 = arith.constant 3 : index
    %c3_48 = arith.constant 3 : index
    %76 = memref.load %arg1[%c3_47, %c3_48] : memref<5x5xf32, #tpu.memory_space<smem>>
    %77 = vector.broadcast %76 : f32 to vector<1x128xf32>
    %78 = arith.mulf %77, %3 : vector<1x128xf32>
    %79 = arith.addf %75, %78 : vector<1x128xf32>
    %c3_49 = arith.constant 3 : index
    %c4_50 = arith.constant 4 : index
    %80 = memref.load %arg1[%c3_49, %c4_50] : memref<5x5xf32, #tpu.memory_space<smem>>
    %81 = vector.broadcast %80 : f32 to vector<1x128xf32>
    %82 = arith.mulf %81, %4 : vector<1x128xf32>
    %83 = arith.addf %79, %82 : vector<1x128xf32>
    %c3_51 = arith.constant 3 : index
    %c0_52 = arith.constant 0 : index
    %84 = vector.load %arg3[%c3_51, %c0_52] : memref<5x128xf32, #tpu.memory_space<vmem>>, vector<1x128xf32>
    tpu.vector_store %arg3[%c3_51, %c0_52], %83 {strides = array<i32>} : memref<5x128xf32, #tpu.memory_space<vmem>>, vector<1x128xf32>,
    %c4_53 = arith.constant 4 : index
    %c0_54 = arith.constant 0 : index
    %85 = memref.load %arg1[%c4_53, %c0_54] : memref<5x5xf32, #tpu.memory_space<smem>>
    %86 = vector.broadcast %85 : f32 to vector<1x128xf32>
    %87 = arith.mulf %86, %0 : vector<1x128xf32>
    %c4_55 = arith.constant 4 : index
    %c1_56 = arith.constant 1 : index
    %88 = memref.load %arg1[%c4_55, %c1_56] : memref<5x5xf32, #tpu.memory_space<smem>>
    %89 = vector.broadcast %88 : f32 to vector<1x128xf32>
    %90 = arith.mulf %89, %1 : vector<1x128xf32>
    %91 = arith.addf %87, %90 : vector<1x128xf32>
    %c4_57 = arith.constant 4 : index
    %c2_58 = arith.constant 2 : index
    %92 = memref.load %arg1[%c4_57, %c2_58] : memref<5x5xf32, #tpu.memory_space<smem>>
    %93 = vector.broadcast %92 : f32 to vector<1x128xf32>
    %94 = arith.mulf %93, %2 : vector<1x128xf32>
    %95 = arith.addf %91, %94 : vector<1x128xf32>
    %c4_59 = arith.constant 4 : index
    %c3_60 = arith.constant 3 : index
    %96 = memref.load %arg1[%c4_59, %c3_60] : memref<5x5xf32, #tpu.memory_space<smem>>
    %97 = vector.broadcast %96 : f32 to vector<1x128xf32>
    %98 = arith.mulf %97, %3 : vector<1x128xf32>
    %99 = arith.addf %95, %98 : vector<1x128xf32>
    %c4_61 = arith.constant 4 : index
    %c4_62 = arith.constant 4 : index
    %100 = memref.load %arg1[%c4_61, %c4_62] : memref<5x5xf32, #tpu.memory_space<smem>>
    %101 = vector.broadcast %100 : f32 to vector<1x128xf32>
    %102 = arith.mulf %101, %4 : vector<1x128xf32>
    %103 = arith.addf %99, %102 : vector<1x128xf32>
    %c4_63 = arith.constant 4 : index
    %c0_64 = arith.constant 0 : index
    %104 = vector.load %arg3[%c4_63, %c0_64] : memref<5x128xf32, #tpu.memory_space<vmem>>, vector<1x128xf32>
    tpu.vector_store %arg3[%c4_63, %c0_64], %103 {strides = array<i32>} : memref<5x128xf32, #tpu.memory_space<vmem>>, vector<1x128xf32>,
    return
  }
  func.func @transform_0(%arg0: i32) -> (i32, i32) {
    %c0_i32 = arith.constant 0 : i32
    %c0_i32_0 = arith.constant 0 : i32
    %c0_i32_1 = arith.constant 0 : i32
    return %c0_i32, %c0_i32_0 : i32, i32
  }
  func.func @transform_1(%arg0: i32) -> (i32, i32) {
    %c0_i32 = arith.constant 0 : i32
    %c0_i32_0 = arith.constant 0 : i32
    return %c0_i32, %arg0 : i32, i32
  }
  func.func @transform_2(%arg0: i32) -> (i32, i32) {
    %c0_i32 = arith.constant 0 : i32
    %c0_i32_0 = arith.constant 0 : i32
    return %c0_i32, %arg0 : i32, i32
  }
}

</mosaic_0001>

<llo_original>
// kernel: simplenet_forward.1
$region0: #{simplenet_forward.1}
  #allocation0 [shape = 'u32[]', space=smem, size = 0x4, offset = 0x4, fixed_abs, tag = 'smem constant byte address 0x4 - core index']
  #allocation1 [shape = 'u32[72,128]{1,0:T(1,128)}', space=vmem, size = 0x9000, scoped, tag = 'internal scratch']
  %s0 = inlined_call_operand.vmem [shape: f32[5,5], index: 0, kind: input, shape index: {}]
  %s1 = inlined_call_operand.vmem [shape: f32[5,128], index: 1, kind: input, shape index: {}]
  %s2 = inlined_call_operand.vmem [shape: f32[5,128], index: 2, kind: output, shape index: {}]
  %s3 = sld [smem:[#allocation0]]
  $region22: #{simplenet_forward.1} parent=0
    _
  %s5 = ssub.s32 1, %s3
  %s6 = scalar_select 0, %s5, %s3
  $region1: #{simplenet_forward.1} parent=0
    #allocation2 [shape = 'u8[4096]{0}', space=smem, size = 0x1000, scoped, tag = 'input window, operand 0, single buffered']
    #allocation3 [shape = 's32[1]{0}', space=sflag, size = 0x4, scoped, tag = 'scoped memory for simplenet_forward.1']
    %7 = vsyncpa [#allocation3], 0
    // Predicated region
    $region2: #{simplenet_forward.1} parent=1 // pred_check
      _
    $region3: #{simplenet_forward.1} parent=1 // pred_check_branch
      %9 = sbr.rel (0) target = $region5
    $region4: #{simplenet_forward.1} parent=1 // pred_region
      %11 = vsyncadd [#allocation3], 0
      %s13 = sshll.u32 %s0, 4
      %s14 = int_to_ptr.vmem [resolvable:$true] %s13
      %16 = dma.vmem_to_smem %s14, 128, [#allocation2], [#allocation3]
    $region5: #{simplenet_forward.1} parent=1 // pred_fallthru
      _
    // Predicated region
    $region6: #{simplenet_forward.1} parent=1 // pred_check
      _
    $region7: #{simplenet_forward.1} parent=1 // pred_check_branch
      %18 = sbr.rel (0) target = $region9
    $region8: #{simplenet_forward.1} parent=1 // pred_region
      _
    $region9: #{simplenet_forward.1} parent=1 // pred_fallthru
      _
    // Predicated region
    $region10: #{simplenet_forward.1} parent=1 // pred_check
      _
    $region11: #{simplenet_forward.1} parent=1 // pred_check_branch
      %20 = sbr.rel (0) target = $region13
    $region12: #{simplenet_forward.1} parent=1 // pred_region
      %22 = dma.done [#allocation3], 128
    $region13: #{simplenet_forward.1} parent=1 // pred_fallthru
      _
    %23 = sfence
    %v24 = vld [vmem:[%s1] sm:$0x1]
    %v25 = vld [vmem:[%s1 + $0x1] sm:$0x1]
    %v26 = vld [vmem:[%s1 + $0x2] sm:$0x1]
    %v27 = vld [vmem:[%s1 + $0x3] sm:$0x1]
    %v28 = vld [vmem:[%s1 + $0x4] sm:$0x1]
    %s29 = sld [smem:[#allocation2]]
    %v30 = vstv %s29
    %v31 = vmul.f32 %v30, %v24
    %s32 = sld [smem:[#allocation2 + $0x1]]
    %v33 = vstv %s32
    %v34 = vmul.f32 %v33, %v25
    %v35 = vadd.f32 %v31, %v34
    %s36 = sld [smem:[#allocation2 + $0x2]]
    %v37 = vstv %s36
    %v38 = vmul.f32 %v37, %v26
    %v39 = vadd.f32 %v35, %v38
    %s40 = sld [smem:[#allocation2 + $0x3]]
    %v41 = vstv %s40
    %v42 = vmul.f32 %v41, %v27
    %v43 = vadd.f32 %v39, %v42
    %s44 = sld [smem:[#allocation2 + $0x4]]
    %v45 = vstv %s44
    %v46 = vmul.f32 %v45, %v28
    %v47 = vadd.f32 %v43, %v46
    %48 = vst [vmem:[%s2] sm:$0x1] %v47
    %s49 = sld [smem:[#allocation2 + $0x80]]
    %v50 = vstv %s49
    %v51 = vmul.f32 %v50, %v24
    %s52 = sld [smem:[#allocation2 + $0x81]]
    %v53 = vstv %s52
    %v54 = vmul.f32 %v53, %v25
    %v55 = vadd.f32 %v51, %v54
    %s56 = sld [smem:[#allocation2 + $0x82]]
    %v57 = vstv %s56
    %v58 = vmul.f32 %v57, %v26
    %v59 = vadd.f32 %v55, %v58
    %s60 = sld [smem:[#allocation2 + $0x83]]
    %v61 = vstv %s60
    %v62 = vmul.f32 %v61, %v27
    %v63 = vadd.f32 %v59, %v62
    %s64 = sld [smem:[#allocation2 + $0x84]]
    %v65 = vstv %s64
    %v66 = vmul.f32 %v65, %v28
    %v67 = vadd.f32 %v63, %v66
    %68 = vst [vmem:[%s2 + $0x1] sm:$0x1] %v67
    %s69 = sld [smem:[#allocation2 + $0x100]]
    %v70 = vstv %s69
    %v71 = vmul.f32 %v70, %v24
    %s72 = sld [smem:[#allocation2 + $0x101]]
    %v73 = vstv %s72
    %v74 = vmul.f32 %v73, %v25
    %v75 = vadd.f32 %v71, %v74
    %s76 = sld [smem:[#allocation2 + $0x102]]
    %v77 = vstv %s76
    %v78 = vmul.f32 %v77, %v26
    %v79 = vadd.f32 %v75, %v78
    %s80 = sld [smem:[#allocation2 + $0x103]]
    %v81 = vstv %s80
    %v82 = vmul.f32 %v81, %v27
    %v83 = vadd.f32 %v79, %v82
    %s84 = sld [smem:[#allocation2 + $0x104]]
    %v85 = vstv %s84
    %v86 = vmul.f32 %v85, %v28
    %v87 = vadd.f32 %v83, %v86
    %88 = vst [vmem:[%s2 + $0x2] sm:$0x1] %v87
    %s89 = sld [smem:[#allocation2 + $0x180]]
    %v90 = vstv %s89
    %v91 = vmul.f32 %v90, %v24
    %s92 = sld [smem:[#allocation2 + $0x181]]
    %v93 = vstv %s92
    %v94 = vmul.f32 %v93, %v25
    %v95 = vadd.f32 %v91, %v94
    %s96 = sld [smem:[#allocation2 + $0x182]]
    %v97 = vstv %s96
    %v98 = vmul.f32 %v97, %v26
    %v99 = vadd.f32 %v95, %v98
    %s100 = sld [smem:[#allocation2 + $0x183]]
    %v101 = vstv %s100
    %v102 = vmul.f32 %v101, %v27
    %v103 = vadd.f32 %v99, %v102
    %s104 = sld [smem:[#allocation2 + $0x184]]
    %v105 = vstv %s104
    %v106 = vmul.f32 %v105, %v28
    %v107 = vadd.f32 %v103, %v106
    %108 = vst [vmem:[%s2 + $0x3] sm:$0x1] %v107
    %s109 = sld [smem:[#allocation2 + $0x200]]
    %v110 = vstv %s109
    %v111 = vmul.f32 %v110, %v24
    %s112 = sld [smem:[#allocation2 + $0x201]]
    %v113 = vstv %s112
    %v114 = vmul.f32 %v113, %v25
    %v115 = vadd.f32 %v111, %v114
    %s116 = sld [smem:[#allocation2 + $0x202]]
    %v117 = vstv %s116
    %v118 = vmul.f32 %v117, %v26
    %v119 = vadd.f32 %v115, %v118
    %s120 = sld [smem:[#allocation2 + $0x203]]
    %v121 = vstv %s120
    %v122 = vmul.f32 %v121, %v27
    %v123 = vadd.f32 %v119, %v122
    %s124 = sld [smem:[#allocation2 + $0x204]]
    %v125 = vstv %s124
    %v126 = vmul.f32 %v125, %v28
    %v127 = vadd.f32 %v123, %v126
    %128 = vst [vmem:[%s2 + $0x4] sm:$0x1] %v127
    // Predicated region
    $region14: #{simplenet_forward.1} parent=1 // pred_check
      _
    $region15: #{simplenet_forward.1} parent=1 // pred_check_branch
      %130 = sbr.rel (0) target = $region17
    $region16: #{simplenet_forward.1} parent=1 // pred_region
      _
    $region17: #{simplenet_forward.1} parent=1 // pred_fallthru
      _
    // Predicated region
    $region18: #{simplenet_forward.1} parent=1 // pred_check
      _
    $region19: #{simplenet_forward.1} parent=1 // pred_check_branch
      %132 = sbr.rel (0) target = $region21
    $region20: #{simplenet_forward.1} parent=1 // pred_region
      _
    $region21: #{simplenet_forward.1} parent=1 // pred_fallthru
      _
    %133 = vsyncpa [#allocation3], 1

</llo_original>
